<compile_context>
chip_gen: v7x
topology: tpu7x:2x2x1
jax: 0.10.0
libtpu: 0.0.40
codegen_flags: <defaults>
</compile_context>

<pallas_src>
import functools

import jax
import jax.numpy as jnp
from jax.experimental import pallas as pl
from jax.experimental.pallas import tpu as pltpu

_LANE = 128


def _round_up(n, m):
    return ((n + m - 1) // m) * m


# ---------------------------------------------------------------------------
# Kernels
# ---------------------------------------------------------------------------
def _mlp2_kernel(x_ref, z_ref, w1x_ref, w1z_ref, b1_ref, w2_ref, b2_ref, o_ref):
    # Fused concat: h = relu(x @ W1_x + z @ W1_z + b1); out = h @ W2 + b2.
    h = jnp.dot(x_ref[...], w1x_ref[...], preferred_element_type=jnp.float32)
    h = h + jnp.dot(z_ref[...], w1z_ref[...], preferred_element_type=jnp.float32)
    h = jnp.maximum(h + b1_ref[...], 0.0)                      # ReLU on VPU
    out = jnp.dot(h.astype(w2_ref.dtype), w2_ref[...],
                  preferred_element_type=jnp.float32)
    o_ref[...] = (out + b2_ref[...]).astype(o_ref.dtype)


def _mlp1_kernel(x_ref, w1_ref, b1_ref, w2_ref, b2_ref, o_ref):
    h = jnp.dot(x_ref[...], w1_ref[...], preferred_element_type=jnp.float32)
    h = jnp.maximum(h + b1_ref[...], 0.0)
    out = jnp.dot(h.astype(w2_ref.dtype), w2_ref[...],
                  preferred_element_type=jnp.float32)
    o_ref[...] = (out + b2_ref[...]).astype(o_ref.dtype)


# ---------------------------------------------------------------------------
# Wrappers
# ---------------------------------------------------------------------------
def _compiler_params(tb, d_in, hp, dop, itemsize=4):
    # Explicit VMEM budget; matters on v7x (64 MiB physical / 32 MiB scoped).
    tiles = 2 * tb * (d_in + dop) * itemsize            # double-buffered in/out
    weights = 2 * (d_in * hp + hp * dop + hp + dop) * itemsize
    scratch = tb * (hp + dop) * 4                       # f32 intermediates
    budget = int(1.5 * (tiles + weights + scratch))
    vmem = min(max(budget, 16 * 1024 * 1024), 64 * 1024 * 1024)
    return pltpu.CompilerParams(
        dimension_semantics=("parallel",),              # batch tiles -> both TCs (v7x)
        vmem_limit_bytes=vmem,
    )


@functools.partial(jax.jit, static_argnames=("out_dim", "tile_b"))
def fused_mlp2(x, z, w1x, w1z, b1, w2, b2, *, out_dim, tile_b=512):
    """relu(x @ W1_x + z @ W1_z + b1) @ W2 + b2 with concat fused in-kernel."""
    B = x.shape[0]
    Dx, Hp = w1x.shape
    Dz = w1z.shape[0]
    Dop = w2.shape[1]

    TB = B if B <= tile_b else tile_b
    nb = pl.cdiv(B, TB)
    Bp = nb * TB
    if Bp != B:
        x = jnp.pad(x, ((0, Bp - B), (0, 0)))
        z = jnp.pad(z, ((0, Bp - B), (0, 0)))

    out = pl.pallas_call(
        _mlp2_kernel,
        out_shape=jax.ShapeDtypeStruct((Bp, Dop), x.dtype),
        grid_spec=pl.GridSpec(
            grid=(nb,),
            in_specs=[
                pl.BlockSpec((TB, Dx), lambda i: (i, 0)),
                pl.BlockSpec((TB, Dz), lambda i: (i, 0)),
                pl.BlockSpec((Dx, Hp), lambda i: (0, 0)),
                pl.BlockSpec((Dz, Hp), lambda i: (0, 0)),
                pl.BlockSpec((1, Hp), lambda i: (0, 0)),
                pl.BlockSpec((Hp, Dop), lambda i: (0, 0)),
                pl.BlockSpec((1, Dop), lambda i: (0, 0)),
            ],
            out_specs=pl.BlockSpec((TB, Dop), lambda i: (i, 0)),
        ),
        compiler_params=_compiler_params(TB, Dx + Dz, Hp, Dop),
    )(x, z, w1x, w1z, b1, w2, b2)
    return out[:B, :out_dim]


@functools.partial(jax.jit, static_argnames=("out_dim", "tile_b"))
def fused_mlp1(x, w1, b1, w2, b2, *, out_dim, tile_b=512):
    """relu(x @ W1 + b1) @ W2 + b2 (single pre-mixed input)."""
    B = x.shape[0]
    D, Hp = w1.shape
    Dop = w2.shape[1]

    TB = B if B <= tile_b else tile_b
    nb = pl.cdiv(B, TB)
    Bp = nb * TB
    if Bp != B:
        x = jnp.pad(x, ((0, Bp - B), (0, 0)))

    out = pl.pallas_call(
        _mlp1_kernel,
        out_shape=jax.ShapeDtypeStruct((Bp, Dop), x.dtype),
        grid_spec=pl.GridSpec(
            grid=(nb,),
            in_specs=[
                pl.BlockSpec((TB, D), lambda i: (i, 0)),
                pl.BlockSpec((D, Hp), lambda i: (0, 0)),
                pl.BlockSpec((1, Hp), lambda i: (0, 0)),
                pl.BlockSpec((Hp, Dop), lambda i: (0, 0)),
                pl.BlockSpec((1, Dop), lambda i: (0, 0)),
            ],
            out_specs=pl.BlockSpec((TB, Dop), lambda i: (i, 0)),
        ),
        compiler_params=_compiler_params(TB, D, Hp, Dop),
    )(x, w1, b1, w2, b2)
    return out[:B, :out_dim]


# ---------------------------------------------------------------------------
# Model
# ---------------------------------------------------------------------------
def _init_linear(key, fan_in, fan_out, *, pad_in=None, pad_out=None,
                 dtype=jnp.float32):
    """PyTorch nn.Linear default init, stored transposed [fan_in, fan_out],
    zero-padded out to lane-dense widths (padded rows/cols are exact zeros,
    so results are unchanged)."""
    pad_in = fan_in if pad_in is None else pad_in
    pad_out = fan_out if pad_out is None else pad_out
    kw, kb = jax.random.split(key)
    bound = 1.0 / float(fan_in) ** 0.5
    w = jax.random.uniform(kw, (fan_in, fan_out), dtype, -bound, bound)
    b = jax.random.uniform(kb, (1, fan_out), dtype, -bound, bound)
    w = jnp.pad(w, ((0, pad_in - fan_in), (0, pad_out - fan_out)))
    b = jnp.pad(b, ((0, 0), (0, pad_out - fan_out)))
    return w, b


class PallasModel:
    """JAX/Pallas equivalent of the PyTorch Model (net + invnet MLPs)."""

    def __init__(self, *, z_space_size, x_space_size, y_space_size,
                 hidden_size, key, dtype=jnp.float32):
        # TODO(synk): on v6e/v7x at real sizes store weights in bf16 (keep
        # f32 accumulation); kept f32 here to match the f32 reference exactly.
        self.x_dim = x_space_size
        self.hidden = hidden_size
        hp = _round_up(hidden_size, _LANE)
        yp = _round_up(max(y_space_size, 1), _LANE)
        zp = _round_up(max(z_space_size, 1), _LANE)

        k1, k2, k3, k4 = jax.random.split(key, 4)

        # net: cat(x, z) -> hidden -> y   (x rows first, then z rows)
        w1, b1 = _init_linear(k1, x_space_size + z_space_size, hidden_size,
                              pad_out=hp, dtype=dtype)
        w2, b2 = _init_linear(k2, hidden_size, y_space_size,
                              pad_in=hp, pad_out=yp, dtype=dtype)
        self.net = dict(w1_full=w1, w1_x=w1[:x_space_size],
                        w1_m=w1[x_space_size:], b1=b1, w2=w2, b2=b2,
                        out_dim=y_space_size)

        # invnet: cat(x, y) -> hidden -> z
        w3, b3 = _init_linear(k3, x_space_size + y_space_size, hidden_size,
                              pad_out=hp, dtype=dtype)
        w4, b4 = _init_linear(k4, hidden_size, z_space_size,
                              pad_in=hp, pad_out=zp, dtype=dtype)
        self.invnet = dict(w1_full=w3, w1_x=w3[:x_space_size],
                           w1_m=w3[x_space_size:], b1=b3, w2=w4, b2=b4,
                           out_dim=z_space_size)

    # ---- same entry points as the PyTorch Model -------------------------
    def forward(self, mixed):
        p = self.net
        return fused_mlp1(mixed, p["w1_full"], p["b1"], p["w2"], p["b2"],
                          out_dim=p["out_dim"])

    def forward_z(self, x_pt, z_pt):
        p = self.net
        z2 = z_pt.reshape(z_pt.shape[0], -1)
        if x_pt.shape[1] > 0:
            x2 = x_pt.reshape(x_pt.shape[0], -1)
            return fused_mlp2(x2, z2, p["w1_x"], p["w1_m"], p["b1"],
                              p["w2"], p["b2"], out_dim=p["out_dim"])
        return fused_mlp1(z2, p["w1_m"], p["b1"], p["w2"], p["b2"],
                          out_dim=p["out_dim"])

    def forward_y(self, x_pt, y_pt):
        p = self.invnet
        y2 = y_pt.reshape(y_pt.shape[0], -1)
        if x_pt.shape[1] > 0:
            x2 = x_pt.reshape(x_pt.shape[0], -1)
            return fused_mlp2(x2, y2, p["w1_x"], p["w1_m"], p["b1"],
                              p["w2"], p["b2"], out_dim=p["out_dim"])
        return fused_mlp1(y2, p["w1_m"], p["b1"], p["w2"], p["b2"],
                          out_dim=p["out_dim"])


# ---------------------------------------------------------------------------
# Demo / self-check
# ---------------------------------------------------------------------------
if __name__ == "__main__":
    key = jax.random.PRNGKey(0)
    k_model, k_x, k_z, k_y = jax.random.split(key, 4)

    batch, x_space, z_space, y_space, hidden = 2, 4, 8, 8, 32

    model = PallasModel(z_space_size=z_space, x_space_size=x_space,
                        y_space_size=y_space, hidden_size=hidden, key=k_model)

    x = jax.random.normal(k_x, (batch, x_space), jnp.float32)
    z = jax.random.normal(k_z, (batch, z_space), jnp.float32)
    y = jax.random.normal(k_y, (batch, y_space), jnp.float32)

    out_y = model.forward_z(x, z)      # net((x, z)) -> y-space
    out_z = model.forward_y(x, y)      # invnet((x, y)) -> z-space
    jax.block_until_ready(out_y)
    jax.block_until_ready(out_z)

    # Plain-JAX reference (slice the zero-padded weights back to true shapes).
    def ref_mlp(inp, p, hidden, out_dim):
        w1 = p["w1_full"][:, :hidden]
        h = jnp.maximum(inp @ w1 + p["b1"][:, :hidden], 0.0)
        return h @ p["w2"][:hidden, :out_dim] + p["b2"][:, :out_dim]

    ref_y = ref_mlp(jnp.concatenate((x, z), axis=1), model.net, hidden, y_space)
    ref_z = ref_mlp(jnp.concatenate((x, y), axis=1), model.invnet, hidden, z_space)

    assert out_y.shape == (batch, y_space)
    assert out_z.shape == (batch, z_space)
    assert jnp.allclose(out_y, ref_y, atol=1e-5, rtol=1e-5)
    assert jnp.allclose(out_z, ref_z, atol=1e-5, rtol=1e-5)

    # Also exercise the generic pre-mixed `forward` path.
    out_fwd = model.forward(jnp.concatenate((x, z), axis=1))
    jax.block_until_ready(out_fwd)
    assert jnp.allclose(out_fwd, ref_y, atol=1e-5, rtol=1e-5)

    print("KERNEL_OK")
</pallas_src>

<mosaic_0001>
module attributes {stable_mosaic.version = 11 : i64} {
  func.func @_mlp2_kernel(%arg0: i32, %arg1: memref<2x4xf32, #tpu.memory_space<vmem>>, %arg2: memref<2x8xf32, #tpu.memory_space<vmem>>, %arg3: memref<4x128xf32, #tpu.memory_space<vmem>>, %arg4: memref<8x128xf32, #tpu.memory_space<vmem>>, %arg5: memref<1x128xf32, #tpu.memory_space<vmem>>, %arg6: memref<128x128xf32, #tpu.memory_space<vmem>>, %arg7: memref<1x128xf32, #tpu.memory_space<vmem>>, %arg8: memref<2x128xf32, #tpu.memory_space<vmem>>) attributes {dimension_semantics = [#tpu.dimension_semantics<parallel>], iteration_bounds = array<i64: 1>, scalar_prefetch = 0 : i64, scratch_operands = 0 : i64, tpu.core_type = #tpu.core_type<tc>, window_params = [{transform_indices = @transform_0, window_bounds = array<i64: 2, 4>}, {transform_indices = @transform_1, window_bounds = array<i64: 2, 8>}, {pipeline_mode = #tpu.pipeline_mode<synchronous>, transform_indices = @transform_2, window_bounds = array<i64: 4, 128>}, {pipeline_mode = #tpu.pipeline_mode<synchronous>, transform_indices = @transform_3, window_bounds = array<i64: 8, 128>}, {pipeline_mode = #tpu.pipeline_mode<synchronous>, transform_indices = @transform_4, window_bounds = array<i64: 1, 128>}, {pipeline_mode = #tpu.pipeline_mode<synchronous>, transform_indices = @transform_5, window_bounds = array<i64: 128, 128>}, {pipeline_mode = #tpu.pipeline_mode<synchronous>, transform_indices = @transform_6, window_bounds = array<i64: 1, 128>}, {transform_indices = @transform_7, window_bounds = array<i64: 2, 128>}]} {
    %c0 = arith.constant 0 : index
    %c0_0 = arith.constant 0 : index
    %0 = vector.load %arg1[%c0, %c0_0] : memref<2x4xf32, #tpu.memory_space<vmem>>, vector<2x4xf32>
    %c0_1 = arith.constant 0 : index
    %c0_2 = arith.constant 0 : index
    %1 = vector.load %arg3[%c0_1, %c0_2] : memref<4x128xf32, #tpu.memory_space<vmem>>, vector<4x128xf32>
    %cst = arith.constant dense<0.000000e+00> : vector<2x128xf32>
    %2 = tpu.matmul %0, %1, %cst {dimension_numbers = #tpu.dot_dimension_numbers<[1], [0], [0], [1], [0, 0, 1, 1], [], []>} : vector<2x4xf32>, vector<4x128xf32>, vector<2x128xf32> -> vector<2x128xf32>
    %c0_3 = arith.constant 0 : index
    %c0_4 = arith.constant 0 : index
    %3 = vector.load %arg2[%c0_3, %c0_4] : memref<2x8xf32, #tpu.memory_space<vmem>>, vector<2x8xf32>
    %c0_5 = arith.constant 0 : index
    %c0_6 = arith.constant 0 : index
    %4 = vector.load %arg4[%c0_5, %c0_6] : memref<8x128xf32, #tpu.memory_space<vmem>>, vector<8x128xf32>
    %cst_7 = arith.constant dense<0.000000e+00> : vector<2x128xf32>
    %5 = tpu.matmul %3, %4, %cst_7 {dimension_numbers = #tpu.dot_dimension_numbers<[1], [0], [0], [1], [0, 0, 1, 1], [], []>} : vector<2x8xf32>, vector<8x128xf32>, vector<2x128xf32> -> vector<2x128xf32>
    %6 = arith.addf %2, %5 : vector<2x128xf32>
    %c0_8 = arith.constant 0 : index
    %c0_9 = arith.constant 0 : index
    %7 = vector.load %arg5[%c0_8, %c0_9] : memref<1x128xf32, #tpu.memory_space<vmem>>, vector<1x128xf32>
    %8 = vector.broadcast %7 : vector<1x128xf32> to vector<2x128xf32>
    %9 = arith.addf %6, %8 : vector<2x128xf32>
    %cst_10 = arith.constant 0.000000e+00 : f32
    %10 = vector.broadcast %cst_10 : f32 to vector<2x128xf32>
    %11 = arith.maximumf %9, %10 : vector<2x128xf32>
    %c0_11 = arith.constant 0 : index
    %c0_12 = arith.constant 0 : index
    %12 = vector.load %arg6[%c0_11, %c0_12] : memref<128x128xf32, #tpu.memory_space<vmem>>, vector<128x128xf32>
    %cst_13 = arith.constant dense<0.000000e+00> : vector<2x128xf32>
    %13 = tpu.matmul %11, %12, %cst_13 {dimension_numbers = #tpu.dot_dimension_numbers<[1], [0], [0], [1], [0, 0, 1, 1], [], []>} : vector<2x128xf32>, vector<128x128xf32>, vector<2x128xf32> -> vector<2x128xf32>
    %c0_14 = arith.constant 0 : index
    %c0_15 = arith.constant 0 : index
    %14 = vector.load %arg7[%c0_14, %c0_15] : memref<1x128xf32, #tpu.memory_space<vmem>>, vector<1x128xf32>
    %15 = vector.broadcast %14 : vector<1x128xf32> to vector<2x128xf32>
    %16 = arith.addf %13, %15 : vector<2x128xf32>
    %c0_16 = arith.constant 0 : index
    %c0_17 = arith.constant 0 : index
    %17 = vector.load %arg8[%c0_16, %c0_17] : memref<2x128xf32, #tpu.memory_space<vmem>>, vector<2x128xf32>
    tpu.vector_store %arg8[%c0_16, %c0_17], %16 {strides = array<i32>} : memref<2x128xf32, #tpu.memory_space<vmem>>, vector<2x128xf32>,
    return
  }
  func.func @transform_0(%arg0: i32) -> (i32, i32) {
    %c0_i32 = arith.constant 0 : i32
    %c0_i32_0 = arith.constant 0 : i32
    return %arg0, %c0_i32 : i32, i32
  }
  func.func @transform_1(%arg0: i32) -> (i32, i32) {
    %c0_i32 = arith.constant 0 : i32
    %c0_i32_0 = arith.constant 0 : i32
    return %arg0, %c0_i32 : i32, i32
  }
  func.func @transform_2(%arg0: i32) -> (i32, i32) {
    %c0_i32 = arith.constant 0 : i32
    %c0_i32_0 = arith.constant 0 : i32
    %c0_i32_1 = arith.constant 0 : i32
    return %c0_i32, %c0_i32_0 : i32, i32
  }
  func.func @transform_3(%arg0: i32) -> (i32, i32) {
    %c0_i32 = arith.constant 0 : i32
    %c0_i32_0 = arith.constant 0 : i32
    %c0_i32_1 = arith.constant 0 : i32
    return %c0_i32, %c0_i32_0 : i32, i32
  }
  func.func @transform_4(%arg0: i32) -> (i32, i32) {
    %c0_i32 = arith.constant 0 : i32
    %c0_i32_0 = arith.constant 0 : i32
    %c0_i32_1 = arith.constant 0 : i32
    return %c0_i32, %c0_i32_0 : i32, i32
  }
  func.func @transform_5(%arg0: i32) -> (i32, i32) {
    %c0_i32 = arith.constant 0 : i32
    %c0_i32_0 = arith.constant 0 : i32
    %c0_i32_1 = arith.constant 0 : i32
    return %c0_i32, %c0_i32_0 : i32, i32
  }
  func.func @transform_6(%arg0: i32) -> (i32, i32) {
    %c0_i32 = arith.constant 0 : i32
    %c0_i32_0 = arith.constant 0 : i32
    %c0_i32_1 = arith.constant 0 : i32
    return %c0_i32, %c0_i32_0 : i32, i32
  }
  func.func @transform_7(%arg0: i32) -> (i32, i32) {
    %c0_i32 = arith.constant 0 : i32
    %c0_i32_0 = arith.constant 0 : i32
    return %arg0, %c0_i32 : i32, i32
  }
}

</mosaic_0001>

<llo_original>
// kernel: fused_mlp2.1
$region0: #{fused_mlp2.1}
  #allocation0 [shape = 'u32[]', space=smem, size = 0x4, offset = 0x4, fixed_abs, tag = 'smem constant byte address 0x4 - core index']
  #allocation1 [shape = 'u32[144,128]{1,0:T(1,128)}', space=vmem, size = 0x12000, scoped, tag = 'internal scratch']
  %s0 = inlined_call_operand.hbm [shape: f32[2,4], index: 0, kind: input, shape index: {}]
  %s1 = inlined_call_operand.vmem [shape: f32[2,8], index: 1, kind: input, shape index: {}]
  %s2 = inlined_call_operand.hbm [shape: f32[4,128], index: 2, kind: input, shape index: {}]
  %s3 = inlined_call_operand.vmem [shape: f32[8,128], index: 3, kind: input, shape index: {}]
  %s4 = inlined_call_operand.vmem [shape: f32[1,128], index: 4, kind: input, shape index: {}]
  %s5 = inlined_call_operand.hbm [shape: f32[128,128], index: 5, kind: input, shape index: {}]
  %s6 = inlined_call_operand.vmem [shape: f32[1,128], index: 6, kind: input, shape index: {}]
  %s7 = inlined_call_operand.hbm [shape: f32[2,128], index: 7, kind: output, shape index: {}]
  %s8 = sld [smem:[#allocation0]]
  $region50: #{fused_mlp2.1} parent=0
    _
  %s10 = ssub.s32 1, %s8
  %s11 = scalar_select 0, %s10, %s8
  $region1: #{fused_mlp2.1} parent=0
    #allocation2 [shape = 'u8[1024]{0}', space=vmem, size = 0x400, scoped, tag = 'input window, operand 0, single buffered']
    #allocation3 [shape = 's32[1]{0}', space=sflag, size = 0x4, scoped, tag = 'scoped memory for fused_mlp2.1']
    #allocation4 [shape = 's32[1]{0}', space=sflag, size = 0x4, scoped, tag = 'scoped memory for fused_mlp2.1']
    #allocation5 [shape = 'u8[2048]{0}', space=vmem, size = 0x800, scoped, tag = 'input window, operand 2, single buffered']
    #allocation6 [shape = 's32[1]{0}', space=sflag, size = 0x4, scoped, tag = 'scoped memory for fused_mlp2.1']
    #allocation7 [shape = 'u8[65536]{0}', space=vmem, size = 0x10000, scoped, tag = 'input window, operand 5, single buffered']
    #allocation8 [shape = 'u8[1024]{0}', space=vmem, size = 0x400, scoped, tag = 'output window, operand 0, single buffered']
    %12 = vsyncpa [#allocation3], 0
    %13 = vsyncpa [#allocation6], 0
    %14 = vsyncpa [#allocation4], 0
    // Predicated region
    $region2: #{fused_mlp2.1} parent=1 // pred_check
      _
    $region3: #{fused_mlp2.1} parent=1 // pred_check_branch
      %16 = sbr.rel (0) target = $region5
    $region4: #{fused_mlp2.1} parent=1 // pred_region
      %s18 = ssub.s32 32, 32
      %19 = vsyncadd [#allocation3], %s18
      %s21 = sshll.u32 [#allocation2], 4
      %s22 = int_to_ptr.vmem [resolvable:$true] %s21
      %24 = dma.hbm_to_vmem [thread:$0]  %s0, 32, %s22, [#allocation3]
    $region5: #{fused_mlp2.1} parent=1 // pred_fallthru
      _
    // Predicated region
    $region6: #{fused_mlp2.1} parent=1 // pred_check
      _
    $region7: #{fused_mlp2.1} parent=1 // pred_check_branch
      %26 = sbr.rel (0) target = $region9
    $region8: #{fused_mlp2.1} parent=1 // pred_region
      _
    $region9: #{fused_mlp2.1} parent=1 // pred_fallthru
      _
    // Predicated region
    $region10: #{fused_mlp2.1} parent=1 // pred_check
      _
    $region11: #{fused_mlp2.1} parent=1 // pred_check_branch
      %28 = sbr.rel (0) target = $region13
    $region12: #{fused_mlp2.1} parent=1 // pred_region
      %s30 = ssub.s32 64, 64
      %31 = vsyncadd [#allocation6], %s30
      %s33 = sshll.u32 [#allocation5], 4
      %s34 = int_to_ptr.vmem [resolvable:$true] %s33
      %36 = dma.hbm_to_vmem [thread:$0]  %s2, 64, %s34, [#allocation6]
    $region13: #{fused_mlp2.1} parent=1 // pred_fallthru
      _
    // Predicated region
    $region14: #{fused_mlp2.1} parent=1 // pred_check
      _
    $region15: #{fused_mlp2.1} parent=1 // pred_check_branch
      %38 = sbr.rel (0) target = $region17
    $region16: #{fused_mlp2.1} parent=1 // pred_region
      _
    $region17: #{fused_mlp2.1} parent=1 // pred_fallthru
      _
    // Predicated region
    $region18: #{fused_mlp2.1} parent=1 // pred_check
      _
    $region19: #{fused_mlp2.1} parent=1 // pred_check_branch
      %40 = sbr.rel (0) target = $region21
    $region20: #{fused_mlp2.1} parent=1 // pred_region
      _
    $region21: #{fused_mlp2.1} parent=1 // pred_fallthru
      _
    // Predicated region
    $region22: #{fused_mlp2.1} parent=1 // pred_check
      _
    $region23: #{fused_mlp2.1} parent=1 // pred_check_branch
      %42 = sbr.rel (0) target = $region25
    $region24: #{fused_mlp2.1} parent=1 // pred_region
      %s44 = ssub.s32 2048, 2048
      %45 = vsyncadd [#allocation6], %s44
      %s46 = sshll.u32 [#allocation7], 4
      %s47 = int_to_ptr.vmem [resolvable:$true] %s46
      %52 = dma.hbm_to_vmem [thread:$0]  %s5, 2048, %s47, [#allocation6], 128, 128, 8
    $region25: #{fused_mlp2.1} parent=1 // pred_fallthru
      _
    // Predicated region
    $region26: #{fused_mlp2.1} parent=1 // pred_check
      _
    $region27: #{fused_mlp2.1} parent=1 // pred_check_branch
      %54 = sbr.rel (0) target = $region29
    $region28: #{fused_mlp2.1} parent=1 // pred_region
      _
    $region29: #{fused_mlp2.1} parent=1 // pred_fallthru
      _
    // Predicated region
    $region30: #{fused_mlp2.1} parent=1 // pred_check
      _
    $region31: #{fused_mlp2.1} parent=1 // pred_check_branch
      %56 = sbr.rel (0) target = $region33
    $region32: #{fused_mlp2.1} parent=1 // pred_region
      %57 = dma.done [#allocation3], 32
    $region33: #{fused_mlp2.1} parent=1 // pred_fallthru
      _
    // Predicated region
    $region34: #{fused_mlp2.1} parent=1 // pred_check
      _
    $region35: #{fused_mlp2.1} parent=1 // pred_check_branch
      %59 = sbr.rel (0) target = $region37
    $region36: #{fused_mlp2.1} parent=1 // pred_region
      %60 = dma.done [#allocation6], 64
    $region37: #{fused_mlp2.1} parent=1 // pred_fallthru
      _
    // Predicated region
    $region38: #{fused_mlp2.1} parent=1 // pred_check
      _
    $region39: #{fused_mlp2.1} parent=1 // pred_check_branch
      %62 = sbr.rel (0) target = $region41
    $region40: #{fused_mlp2.1} parent=1 // pred_region
      %63 = dma.done [#allocation6], 2048
    $region41: #{fused_mlp2.1} parent=1 // pred_fallthru
      _
    %v64 = vld [vmem:[#allocation2] sm:$0x3]
    %v65 = vld [vmem:[#allocation5] sm:$0xf]
    %v66 = vld [vmem:[%s1] sm:$0x3]
    %v67 = vld [vmem:[%s3] sm:$0xff]
    %vm68 = vcmask 64512
    %v70 = vsel %vm68, %v66, 0
    %72 = vmatprep.subr.mxu0 0.0
    %73 = vmatpush1.msra.mxu0 %v67
    %74 = vmatprep.subr.mxu0 0.0
    %75 = vmatpush1.msra.mxu0 0.0
    %76 = vmatprep.subr.mxu0 0.0
    %77 = vmatpush1.msra.mxu0 0.0
    %78 = vmatprep.subr.mxu0 0.0
    %79 = vmatpush1.msra.mxu0 0.0
    %80 = vmatprep.subr.mxu0 0.0
    %81 = vmatpush1.msra.mxu0 0.0
    %82 = vmatprep.subr.mxu0 0.0
    %83 = vmatpush1.msra.mxu0 0.0
    %84 = vmatprep.subr.mxu0 0.0
    %85 = vmatpush1.msra.mxu0 0.0
    %86 = vmatprep.subr.mxu0 0.0
    %87 = vmatpush1.msra.mxu0 0.0
    %88 = vmatprep.subr.mxu0 0.0
    %89 = vmatpush1.msra.mxu0 0.0
    %90 = vmatprep.subr.mxu0 0.0
    %91 = vmatpush1.msra.mxu0 0.0
    %92 = vmatprep.subr.mxu0 0.0
    %93 = vmatpush1.msra.mxu0 0.0
    %94 = vmatprep.subr.mxu0 0.0
    %95 = vmatpush1.msra.mxu0 0.0
    %96 = vmatprep.subr.mxu0 0.0
    %97 = vmatpush1.msra.mxu0 0.0
    %98 = vmatprep.subr.mxu0 0.0
    %99 = vmatpush1.msra.mxu0 0.0
    %100 = vmatprep.subr.mxu0 0.0
    %101 = vmatpush1.msra.mxu0 0.0
    %102 = vmatprep.subr.mxu0 0.0
    %103 = vmatpush1.msra.mxu0 0.0
    %104 = vmatprep.subr.mxu0 0.0
    %105 = vmatpush1.msra.mxu0 0.0
    %106 = vmatprep.subr.mxu0 0.0
    %107 = vmatpush1.msra.mxu0 0.0
    %108 = vmatprep.subr.mxu0 0.0
    %109 = vmatpush1.msra.mxu0 0.0
    %110 = vmatprep.subr.mxu0 0.0
    %111 = vmatpush1.msra.mxu0 0.0
    %112 = vmatprep.subr.mxu0 0.0
    %113 = vmatpush1.msra.mxu0 0.0
    %114 = vmatprep.subr.mxu0 0.0
    %115 = vmatpush1.msra.mxu0 0.0
    %116 = vmatprep.subr.mxu0 0.0
    %117 = vmatpush1.msra.mxu0 0.0
    %118 = vmatprep.subr.mxu0 0.0
    %119 = vmatpush1.msra.mxu0 0.0
    %120 = vmatprep.subr.mxu0 0.0
    %121 = vmatpush1.msra.mxu0 0.0
    %122 = vmatprep.subr.mxu0 0.0
    %123 = vmatpush1.msra.mxu0 0.0
    %124 = vmatprep.subr.mxu0 0.0
    %125 = vmatpush1.msra.mxu0 0.0
    %126 = vmatprep.subr.mxu0 0.0
    %127 = vmatpush1.msra.mxu0 0.0
    %128 = vmatprep.subr.mxu0 0.0
    %129 = vmatpush1.msra.mxu0 0.0
    %130 = vmatprep.subr.mxu0 0.0
    %131 = vmatpush1.msra.mxu0 0.0
    %132 = vmatprep.subr.mxu0 0.0
    %133 = vmatpush1.msra.mxu0 0.0
    %134 = vmatprep.subr.mxu0 0.0
    %135 = vmatpush1.msra.mxu0 0.0
    %136 = vmatprep.mubr.f32.mxu0 0.0
    %137 = vmatmul.mubr.f32.gmra.mrb[0].mxu0 %v70
    %v138 = vpop.f32.mrb[0].mxu0
    %v139 = vadd.f32 0.0, %v138
    %v140 = vpop.f32.mrb[0].mxu0
    %141 = vdwg.mxu0
    %vm142 = vcmask 31744
    %v144 = vsel %vm142, %v64, 0
    %vm146 = vcmask 1043456
    %v148 = vsel %vm146, %v65, 0
    %150 = vmatprep.subr.mxu0 0.0
    %151 = vmatpush1.msra.mxu0 %v148
    %152 = vmatprep.subr.mxu0 0.0
    %153 = vmatpush1.msra.mxu0 0.0
    %154 = vmatprep.subr.mxu0 0.0
    %155 = vmatpush1.msra.mxu0 0.0
    %156 = vmatprep.subr.mxu0 0.0
    %157 = vmatpush1.msra.mxu0 0.0
    %158 = vmatprep.subr.mxu0 0.0
    %159 = vmatpush1.msra.mxu0 0.0
    %160 = vmatprep.subr.mxu0 0.0
    %161 = vmatpush1.msra.mxu0 0.0
    %162 = vmatprep.subr.mxu0 0.0
    %163 = vmatpush1.msra.mxu0 0.0
    %164 = vmatprep.subr.mxu0 0.0
    %165 = vmatpush1.msra.mxu0 0.0
    %166 = vmatprep.subr.mxu0 0.0
    %167 = vmatpush1.msra.mxu0 0.0
    %168 = vmatprep.subr.mxu0 0.0
    %169 = vmatpush1.msra.mxu0 0.0
    %170 = vmatprep.subr.mxu0 0.0
    %171 = vmatpush1.msra.mxu0 0.0
    %172 = vmatprep.subr.mxu0 0.0
    %173 = vmatpush1.msra.mxu0 0.0
    %174 = vmatprep.subr.mxu0 0.0
    %175 = vmatpush1.msra.mxu0 0.0
    %176 = vmatprep.subr.mxu0 0.0
    %177 = vmatpush1.msra.mxu0 0.0
    %178 = vmatprep.subr.mxu0 0.0
    %179 = vmatpush1.msra.mxu0 0.0
    %180 = vmatprep.subr.mxu0 0.0
    %181 = vmatpush1.msra.mxu0 0.0
    %182 = vmatprep.subr.mxu0 0.0
    %183 = vmatpush1.msra.mxu0 0.0
    %184 = vmatprep.subr.mxu0 0.0
    %185 = vmatpush1.msra.mxu0 0.0
    %186 = vmatprep.subr.mxu0 0.0
    %187 = vmatpush1.msra.mxu0 0.0
    %188 = vmatprep.subr.mxu0 0.0
    %189 = vmatpush1.msra.mxu0 0.0
    %190 = vmatprep.subr.mxu0 0.0
    %191 = vmatpush1.msra.mxu0 0.0
    %192 = vmatprep.subr.mxu0 0.0
    %193 = vmatpush1.msra.mxu0 0.0
    %194 = vmatprep.subr.mxu0 0.0
    %195 = vmatpush1.msra.mxu0 0.0
    %196 = vmatprep.subr.mxu0 0.0
    %197 = vmatpush1.msra.mxu0 0.0
    %198 = vmatprep.subr.mxu0 0.0
    %199 = vmatpush1.msra.mxu0 0.0
    %200 = vmatprep.subr.mxu0 0.0
    %201 = vmatpush1.msra.mxu0 0.0
    %202 = vmatprep.subr.mxu0 0.0
    %203 = vmatpush1.msra.mxu0 0.0
    %204 = vmatprep.subr.mxu0 0.0
    %205 = vmatpush1.msra.mxu0 0.0
    %206 = vmatprep.subr.mxu0 0.0
    %207 = vmatpush1.msra.mxu0 0.0
    %208 = vmatprep.subr.mxu0 0.0
    %209 = vmatpush1.msra.mxu0 0.0
    %210 = vmatprep.subr.mxu0 0.0
    %211 = vmatpush1.msra.mxu0 0.0
    %212 = vmatprep.subr.mxu0 0.0
    %213 = vmatpush1.msra.mxu0 0.0
    %214 = vmatprep.mubr.f32.mxu0 0.0
    %215 = vmatmul.mubr.f32.gmra.mrb[0].mxu0 %v144
    %v216 = vpop.f32.mrb[0].mxu0
    %v217 = vadd.f32 %v139, %v216
    %v218 = vpop.f32.mrb[0].mxu0
    %219 = vdwg.mxu0
    %v220 = vld [vmem:[%s4] sm:$0x1]
    %v222 = vlaneseq
    %v223 = vshrl.u32 %v222, 7
    %v224 = vsub.s32 0, %v223
    %v225 = vrot.slane %v220, %v224
    %v227 = vadd.f32 %v217, %v225
    %v228 = vmax.f32 %v227, 0.0
    %v229 = vld [vmem:[#allocation7] sm:$0xff]
    %v230 = vld [vmem:[#allocation7 + $0x8] sm:$0xff]
    %v231 = vld [vmem:[#allocation7 + $0x10] sm:$0xff]
    %v232 = vld [vmem:[#allocation7 + $0x18] sm:$0xff]
    %v233 = vld [vmem:[#allocation7 + $0x20] sm:$0xff]
    %v234 = vld [vmem:[#allocation7 + $0x28] sm:$0xff]
    %v235 = vld [vmem:[#allocation7 + $0x30] sm:$0xff]
    %v236 = vld [vmem:[#allocation7 + $0x38] sm:$0xff]
    %v237 = vld [vmem:[#allocation7 + $0x40] sm:$0xff]
    %v238 = vld [vmem:[#allocation7 + $0x48] sm:$0xff]
    %v239 = vld [vmem:[#allocation7 + $0x50] sm:$0xff]
    %v240 = vld [vmem:[#allocation7 + $0x58] sm:$0xff]
    %v241 = vld [vmem:[#allocation7 + $0x60] sm:$0xff]
    %v242 = vld [vmem:[#allocation7 + $0x68] sm:$0xff]
    %v243 = vld [vmem:[#allocation7 + $0x70] sm:$0xff]
    %v244 = vld [vmem:[#allocation7 + $0x78] sm:$0xff]
    %v245 = vld [vmem:[%s6] sm:$0x1]
    %v247 = vlaneseq
    %v248 = vshrl.u32 %v247, 7
    %v249 = vsub.s32 0, %v248
    %v250 = vrot.slane %v245, %v249
    %252 = vmatprep.subr.mxu0 0.0
    %253 = vmatpush1.msra.mxu0 %v229
    %254 = vmatprep.subr.mxu0 0.0
    %255 = vmatpush1.msra.mxu0 %v230
    %256 = vmatprep.subr.mxu0 0.0
    %257 = vmatpush1.msra.mxu0 %v231
    %258 = vmatprep.subr.mxu0 0.0
    %259 = vmatpush1.msra.mxu0 %v232
    %260 = vmatprep.subr.mxu0 0.0
    %261 = vmatpush1.msra.mxu0 %v233
    %262 = vmatprep.subr.mxu0 0.0
    %263 = vmatpush1.msra.mxu0 %v234
    %264 = vmatprep.subr.mxu0 0.0
    %265 = vmatpush1.msra.mxu0 %v235
    %266 = vmatprep.subr.mxu0 0.0
    %267 = vmatpush1.msra.mxu0 %v236
    %268 = vmatprep.subr.mxu0 0.0
    %269 = vmatpush1.msra.mxu0 %v237
    %270 = vmatprep.subr.mxu0 0.0
    %271 = vmatpush1.msra.mxu0 %v238
    %272 = vmatprep.subr.mxu0 0.0
    %273 = vmatpush1.msra.mxu0 %v239
    %274 = vmatprep.subr.mxu0 0.0
    %275 = vmatpush1.msra.mxu0 %v240
    %276 = vmatprep.subr.mxu0 0.0
    %277 = vmatpush1.msra.mxu0 %v241
    %278 = vmatprep.subr.mxu0 0.0
    %279 = vmatpush1.msra.mxu0 %v242
    %280 = vmatprep.subr.mxu0 0.0
    %281 = vmatpush1.msra.mxu0 %v243
    %282 = vmatprep.subr.mxu0 0.0
    %283 = vmatpush1.msra.mxu0 %v244
    %284 = vmatprep.subr.mxu0 0.0
    %285 = vmatpush1.msra.mxu0 0.0
    %286 = vmatprep.subr.mxu0 0.0
    %287 = vmatpush1.msra.mxu0 0.0
    %288 = vmatprep.subr.mxu0 0.0
    %289 = vmatpush1.msra.mxu0 0.0
    %290 = vmatprep.subr.mxu0 0.0
    %291 = vmatpush1.msra.mxu0 0.0
    %292 = vmatprep.subr.mxu0 0.0
    %293 = vmatpush1.msra.mxu0 0.0
    %294 = vmatprep.subr.mxu0 0.0
    %295 = vmatpush1.msra.mxu0 0.0
    %296 = vmatprep.subr.mxu0 0.0
    %297 = vmatpush1.msra.mxu0 0.0
    %298 = vmatprep.subr.mxu0 0.0
    %299 = vmatpush1.msra.mxu0 0.0
    %300 = vmatprep.subr.mxu0 0.0
    %301 = vmatpush1.msra.mxu0 0.0
    %302 = vmatprep.subr.mxu0 0.0
    %303 = vmatpush1.msra.mxu0 0.0
    %304 = vmatprep.subr.mxu0 0.0
    %305 = vmatpush1.msra.mxu0 0.0
    %306 = vmatprep.subr.mxu0 0.0
    %307 = vmatpush1.msra.mxu0 0.0
    %308 = vmatprep.subr.mxu0 0.0
    %309 = vmatpush1.msra.mxu0 0.0
    %310 = vmatprep.subr.mxu0 0.0
    %311 = vmatpush1.msra.mxu0 0.0
    %312 = vmatprep.subr.mxu0 0.0
    %313 = vmatpush1.msra.mxu0 0.0
    %314 = vmatprep.subr.mxu0 0.0
    %315 = vmatpush1.msra.mxu0 0.0
    %316 = vmatprep.mubr.f32.mxu0 0.0
    %317 = vmatmul.mubr.f32.gmra.mrb[0].mxu0 %v228
    %v318 = vpop.f32.mrb[0].mxu0
    %v319 = vadd.f32 %v250, %v318
    %v320 = vpop.f32.mrb[0].mxu0
    %321 = vdwg.mxu0
    %322 = vst [vmem:[#allocation8] sm:$0x3] %v319
    // Predicated region
    $region42: #{fused_mlp2.1} parent=1 // pred_check
      _
    $region43: #{fused_mlp2.1} parent=1 // pred_check_branch
      %324 = sbr.rel (0) target = $region45
    $region44: #{fused_mlp2.1} parent=1 // pred_region
      %s326 = ssub.s32 32, 32
      %327 = vsyncadd [#allocation4], %s326
      %s329 = sshll.u32 [#allocation8], 4
      %s330 = int_to_ptr.vmem [resolvable:$true] %s329
      %332 = dma.vmem_to_hbm [thread:$0]  %s330, 32, %s7, [#allocation4]
    $region45: #{fused_mlp2.1} parent=1 // pred_fallthru
      _
    // Predicated region
    $region46: #{fused_mlp2.1} parent=1 // pred_check
      _
    $region47: #{fused_mlp2.1} parent=1 // pred_check_branch
      %334 = sbr.rel (0) target = $region49
    $region48: #{fused_mlp2.1} parent=1 // pred_region
      %335 = dma.done [#allocation4], 32
    $region49: #{fused_mlp2.1} parent=1 // pred_fallthru
      _
    %336 = vsyncpa [#allocation3], 1
    %337 = vsyncpa [#allocation6], 1
    %338 = vsyncpa [#allocation4], 1

</llo_original>
